<compile_context>
chip_gen: v7x
topology: tpu7x:2x2x1
jax: 0.10.0
libtpu: 0.0.40
codegen_flags: <defaults>
</compile_context>

<pallas_src>
import jax
import jax.numpy as jnp
from jax.experimental import pallas as pl
from jax.experimental.pallas import tpu as pltpu


LANE = 128          # vreg lane width; minimum batch tile
MAX_TILE_N = 32768  # lanes per block for large batches (multiple of 128)


def _round_up(a, m):
    return (a + m - 1) // m * m


def linear_vpu_kernel(x_ref, w_ref, b_ref, o_ref):
    # x_ref: VMEM (2, tile_n)  -- features on sublanes, batch on lanes
    # w_ref: SMEM (2,)         -- [W[0,0], W[0,1]]
    # b_ref: SMEM (1,)
    # o_ref: VMEM (1, tile_n)
    x = x_ref[...]
    w0 = w_ref[0]
    w1 = w_ref[1]
    b = b_ref[0]
    # Pure VPU: two scalar*vector muls + adds; no MXU for K=2, N_out=1.
    y = x[0:1, :] * w0 + x[1:2, :] * w1 + b
    o_ref[...] = y.astype(o_ref.dtype)


def custom_model_forward(x, weight, bias):
    """Equivalent of CustomModel.forward (nn.Linear(2, 1)).

    Args:
      x:      (N, 2) float32
      weight: (1, 2) float32  -- PyTorch nn.Linear convention (out, in)
      bias:   (1,)   float32
    Returns:
      (N, 1) float32
    """
    n, f_in = x.shape
    assert f_in == 2 and weight.shape == (1, 2) and bias.shape == (1,)

    # Adaptive lane tiling: one tile for small batches, big tiles for large.
    n_pad = _round_up(n, LANE)
    tile_n = min(n_pad, MAX_TILE_N)
    n_pad = _round_up(n_pad, tile_n)
    num_tiles = n_pad // tile_n

    # Lane-dense layout: (2, N) with batch on the lane axis, zero-padded.
    x_t = x.T.astype(jnp.float32)                       # (2, N)
    if n_pad != n:
        x_t = jnp.pad(x_t, ((0, 0), (0, n_pad - n)))    # zero-pad dead lanes

    w_flat = weight.reshape(2).astype(jnp.float32)      # (2,) -> SMEM
    b_flat = bias.reshape(1).astype(jnp.float32)        # (1,) -> SMEM

    out = pl.pallas_call(
        linear_vpu_kernel,
        out_shape=jax.ShapeDtypeStruct((1, n_pad), jnp.float32),
        grid=(num_tiles,),
        in_specs=[
            pl.BlockSpec((2, tile_n), lambda i: (0, i)),           # x tile (VMEM)
            pl.BlockSpec(memory_space=pltpu.MemorySpace.SMEM),     # weights
            pl.BlockSpec(memory_space=pltpu.MemorySpace.SMEM),     # bias
        ],
        out_specs=pl.BlockSpec((1, tile_n), lambda i: (0, i)),
        compiler_params=pltpu.CompilerParams(
            dimension_semantics=("parallel",),     # shard tiles across TCs (v7x)
            vmem_limit_bytes=32 * 1024 * 1024,     # portable to v7x's 64 MiB VMEM
        ),
    )(x_t, w_flat, b_flat)

    # Back to the PyTorch output layout (N, 1), dropping padded lanes.
    return out[0, :n].reshape(n, 1)


if __name__ == "__main__":
    key = jax.random.PRNGKey(0)
    k_x, k_w, k_b, k_x2 = jax.random.split(key, 4)

    # Small shapes implied by the module: Linear(2, 1) acting on (batch, 2).
    batch = 8
    x = jax.random.normal(k_x, (batch, 2), dtype=jnp.float32)

    # Deterministic synthetic parameters (same shapes as nn.Linear(2, 1)).
    weight = jax.random.normal(k_w, (1, 2), dtype=jnp.float32) * 0.5
    bias = jax.random.normal(k_b, (1,), dtype=jnp.float32) * 0.1

    y = custom_model_forward(x, weight, bias)
    jax.block_until_ready(y)

    y_ref = x @ weight.T + bias
    assert y.shape == (batch, 1)
    assert jnp.allclose(y, y_ref, atol=1e-5), "mismatch vs reference (small batch)"

    # Exercise the multi-tile + padding path (non-multiple of the lane tile).
    batch2 = 700
    x2 = jax.random.normal(k_x2, (batch2, 2), dtype=jnp.float32)
    y2 = custom_model_forward(x2, weight, bias)
    jax.block_until_ready(y2)
    y2_ref = x2 @ weight.T + bias
    assert y2.shape == (batch2, 1)
    assert jnp.allclose(y2, y2_ref, atol=1e-5), "mismatch vs reference (tiled batch)"

    print("KERNEL_OK")
</pallas_src>

<mosaic_0001>
module attributes {stable_mosaic.version = 11 : i64} {
  func.func @linear_vpu_kernel(%arg0: i32, %arg1: memref<2x128xf32, #tpu.memory_space<vmem>>, %arg2: memref<2xf32, #tpu.memory_space<smem>>, %arg3: memref<1xf32, #tpu.memory_space<smem>>, %arg4: memref<1x128xf32, #tpu.memory_space<vmem>>) attributes {dimension_semantics = [#tpu.dimension_semantics<parallel>], iteration_bounds = array<i64: 1>, scalar_prefetch = 0 : i64, scratch_operands = 0 : i64, tpu.core_type = #tpu.core_type<tc>, window_params = [{transform_indices = @transform_0, window_bounds = array<i64: 2, 128>}, {transform_indices = @transform_1, window_bounds = array<i64: 2>}, {transform_indices = @transform_2, window_bounds = array<i64: 1>}, {transform_indices = @transform_3, window_bounds = array<i64: 1, 128>}]} {
    %c0 = arith.constant 0 : index
    %c0_0 = arith.constant 0 : index
    %0 = vector.load %arg1[%c0, %c0_0] : memref<2x128xf32, #tpu.memory_space<vmem>>, vector<2x128xf32>
    %c0_1 = arith.constant 0 : index
    %1 = memref.load %arg2[%c0_1] : memref<2xf32, #tpu.memory_space<smem>>
    %c1 = arith.constant 1 : index
    %2 = memref.load %arg2[%c1] : memref<2xf32, #tpu.memory_space<smem>>
    %c0_2 = arith.constant 0 : index
    %3 = memref.load %arg3[%c0_2] : memref<1xf32, #tpu.memory_space<smem>>
    %4 = vector.extract_strided_slice %0 {offsets = [0, 0], sizes = [1, 128], strides = [1, 1]} : vector<2x128xf32> to vector<1x128xf32>
    %5 = vector.broadcast %1 : f32 to vector<1x128xf32>
    %6 = arith.mulf %4, %5 : vector<1x128xf32>
    %7 = vector.extract_strided_slice %0 {offsets = [1, 0], sizes = [1, 128], strides = [1, 1]} : vector<2x128xf32> to vector<1x128xf32>
    %8 = vector.broadcast %2 : f32 to vector<1x128xf32>
    %9 = arith.mulf %7, %8 : vector<1x128xf32>
    %10 = arith.addf %6, %9 : vector<1x128xf32>
    %11 = vector.broadcast %3 : f32 to vector<1x128xf32>
    %12 = arith.addf %10, %11 : vector<1x128xf32>
    %c0_3 = arith.constant 0 : index
    %c0_4 = arith.constant 0 : index
    %13 = vector.load %arg4[%c0_3, %c0_4] : memref<1x128xf32, #tpu.memory_space<vmem>>, vector<1x128xf32>
    tpu.vector_store %arg4[%c0_3, %c0_4], %12 {strides = array<i32>} : memref<1x128xf32, #tpu.memory_space<vmem>>, vector<1x128xf32>,
    return
  }
  func.func @transform_0(%arg0: i32) -> (i32, i32) {
    %c0_i32 = arith.constant 0 : i32
    %c0_i32_0 = arith.constant 0 : i32
    return %c0_i32, %arg0 : i32, i32
  }
  func.func @transform_1(%arg0: i32) -> i32 {
    %c0_i32 = arith.constant 0 : i32
    %c0_i32_0 = arith.constant 0 : i32
    return %c0_i32 : i32
  }
  func.func @transform_2(%arg0: i32) -> i32 {
    %c0_i32 = arith.constant 0 : i32
    %c0_i32_0 = arith.constant 0 : i32
    return %c0_i32 : i32
  }
  func.func @transform_3(%arg0: i32) -> (i32, i32) {
    %c0_i32 = arith.constant 0 : i32
    %c0_i32_0 = arith.constant 0 : i32
    return %c0_i32, %arg0 : i32, i32
  }
}

</mosaic_0001>

<llo_original>
// kernel: tpu_custom_call.1
$region0: #{tpu_custom_call.1}
  #allocation0 [shape = 'u32[]', space=smem, size = 0x4, offset = 0x4, fixed_abs, tag = 'smem constant byte address 0x4 - core index']
  #allocation1 [shape = 'u32[144,128]{1,0:T(1,128)}', space=vmem, size = 0x12000, scoped, tag = 'internal scratch']
  #allocation2 [shape = 'f32[1]{0:T(128)S(6)}', space=smem, size = 0x200, scoped, tag = 'scoped memory for tpu_custom_call.1']
  %s0 = inlined_call_operand.vmem [shape: f32[2,128], index: 0, kind: input, shape index: {}]
  %s1 = inlined_call_operand.vmem [shape: f32[2], index: 1, kind: input, shape index: {}]
  %s2 = inlined_call_operand.<no memory space> [shape: f32[1], index: 2, kind: input, shape index: {}]
  %s3 = inlined_call_operand.hbm [shape: f32[1,128], index: 3, kind: output, shape index: {}]
  %s4 = sld [smem:[#allocation0]]
  $region26: #{tpu_custom_call.1} parent=0
    _
  %s6 = ssub.s32 1, %s4
  %s7 = scalar_select 0, %s6, %s4
  %8 = sst [smem:[#allocation2]] %s2
  $region1: #{tpu_custom_call.1} parent=0
    #allocation3 [shape = 'u8[512]{0}', space=smem, size = 0x200, scoped, tag = 'input window, operand 1, single buffered']
    #allocation4 [shape = 's32[1]{0}', space=sflag, size = 0x4, scoped, tag = 'scoped memory for tpu_custom_call.1']
    #allocation5 [shape = 's32[1]{0}', space=sflag, size = 0x4, scoped, tag = 'scoped memory for tpu_custom_call.1']
    #allocation6 [shape = 'u8[512]{0}', space=vmem, size = 0x400, scoped, tag = 'output window, operand 0, single buffered']
    %9 = vsyncpa [#allocation5], 0
    %10 = vsyncpa [#allocation4], 0
    // Predicated region
    $region2: #{tpu_custom_call.1} parent=1 // pred_check
      _
    $region3: #{tpu_custom_call.1} parent=1 // pred_check_branch
      %12 = sbr.rel (0) target = $region5
    $region4: #{tpu_custom_call.1} parent=1 // pred_region
      _
    $region5: #{tpu_custom_call.1} parent=1 // pred_fallthru
      _
    // Predicated region
    $region6: #{tpu_custom_call.1} parent=1 // pred_check
      _
    $region7: #{tpu_custom_call.1} parent=1 // pred_check_branch
      %14 = sbr.rel (0) target = $region9
    $region8: #{tpu_custom_call.1} parent=1 // pred_region
      %s16 = ssub.s32 16, 16
      %17 = vsyncadd [#allocation5], %s16
      %s19 = sshll.u32 %s1, 4
      %s20 = int_to_ptr.vmem [resolvable:$true] %s19
      %22 = dma.vmem_to_smem %s20, 16, [#allocation3], [#allocation5]
    $region9: #{tpu_custom_call.1} parent=1 // pred_fallthru
      _
    // Predicated region
    $region10: #{tpu_custom_call.1} parent=1 // pred_check
      _
    $region11: #{tpu_custom_call.1} parent=1 // pred_check_branch
      %24 = sbr.rel (0) target = $region13
    $region12: #{tpu_custom_call.1} parent=1 // pred_region
      _
    $region13: #{tpu_custom_call.1} parent=1 // pred_fallthru
      _
    // Predicated region
    $region14: #{tpu_custom_call.1} parent=1 // pred_check
      _
    $region15: #{tpu_custom_call.1} parent=1 // pred_check_branch
      %26 = sbr.rel (0) target = $region17
    $region16: #{tpu_custom_call.1} parent=1 // pred_region
      %27 = dma.done [#allocation5], 16
    $region17: #{tpu_custom_call.1} parent=1 // pred_fallthru
      _
    %28 = sfence
    %v29 = vld [vmem:[%s0] sm:$0x3]
    %s30 = sld [smem:[#allocation3]]
    %s31 = sld [smem:[#allocation3 + $0x1]]
    %s32 = sld [smem:[#allocation2]]
    %v33 = vstv %s30
    %v34 = vmul.f32 %v29, %v33
    %v35 = vstv %s31
    %v36 = vmul.f32 %v29, %v35
    %v38 = vrot.slane %v36, 1
    %v40 = vadd.f32 %v34, %v38
    %v41 = vstv %s32
    %v42 = vadd.f32 %v40, %v41
    %43 = vst [vmem:[#allocation6] sm:$0x1] %v42
    // Predicated region
    $region18: #{tpu_custom_call.1} parent=1 // pred_check
      _
    $region19: #{tpu_custom_call.1} parent=1 // pred_check_branch
      %45 = sbr.rel (0) target = $region21
    $region20: #{tpu_custom_call.1} parent=1 // pred_region
      %s47 = ssub.s32 16, 16
      %48 = vsyncadd [#allocation4], %s47
      %s50 = sshll.u32 [#allocation6], 4
      %s51 = int_to_ptr.vmem [resolvable:$true] %s50
      %53 = dma.vmem_to_hbm [thread:$0]  %s51, 16, %s3, [#allocation4]
    $region21: #{tpu_custom_call.1} parent=1 // pred_fallthru
      _
    // Predicated region
    $region22: #{tpu_custom_call.1} parent=1 // pred_check
      _
    $region23: #{tpu_custom_call.1} parent=1 // pred_check_branch
      %55 = sbr.rel (0) target = $region25
    $region24: #{tpu_custom_call.1} parent=1 // pred_region
      %56 = dma.done [#allocation4], 16
    $region25: #{tpu_custom_call.1} parent=1 // pred_fallthru
      _
    %57 = vsyncpa [#allocation4], 1
    %58 = vsyncpa [#allocation5], 1

</llo_original>
